<compile_context>
chip_gen: v7x
topology: tpu7x:2x2x1
jax: 0.10.0
libtpu: 0.0.40
codegen_flags: <defaults>
</compile_context>

<pallas_src>
import jax
import jax.numpy as jnp
from jax import lax
from jax.experimental import pallas as pl
from jax.experimental.pallas import tpu as pltpu


# ----------------------------------------------------------------------------
# Kernels
# ----------------------------------------------------------------------------
def _tms_fused_kernel(x_ref, we_ref, wd_ref, b_ref, o_ref):
    # x_ref:  (tB, n_inst*F)        lane-dense input slab for this batch tile
    # we_ref: (n_inst*F, n_inst*H)  block-diagonal encode weights (resident)
    # wd_ref: (n_inst*H, n_inst*F)  block-diagonal decode weights (resident)
    # b_ref:  (1, n_inst*F)         bias slab (resident)
    # o_ref:  (tB, n_inst*F)        lane-dense output slab
    x = x_ref[...]
    h = jnp.dot(x, we_ref[...], preferred_element_type=jnp.float32)
    dec = jnp.dot(h, wd_ref[...], preferred_element_type=jnp.float32)
    dec = dec + b_ref[...].astype(jnp.float32)
    o_ref[...] = jnp.maximum(dec, 0.0).astype(o_ref.dtype)


def _tms_loop_kernel(x_ref, w_ref, b_ref, o_ref):
    # Fallback for large n_inst*F / n_inst*H where the block-diagonal weights
    # would be wastefully big.  Static trace-time loop over instances.
    n_inst, d_hidden, n_feat = w_ref.shape
    x = x_ref[...]
    w = w_ref[...]
    b = b_ref[...]

    outs = []
    for i in range(n_inst):
        xi = x[:, i * n_feat:(i + 1) * n_feat]          # (tB, F)
        wi = w[i]                                       # (H, F)
        # encode: contract over F directly (no materialized wi.T)
        h = lax.dot_general(
            xi, wi,
            dimension_numbers=(((1,), (1,)), ((), ())),
            preferred_element_type=jnp.float32)         # (tB, H)
        dec = jnp.dot(h, wi, preferred_element_type=jnp.float32) + b[i]
        outs.append(jnp.maximum(dec, 0.0))
    o_ref[...] = jnp.concatenate(outs, axis=-1).astype(o_ref.dtype)


# ----------------------------------------------------------------------------
# Wrapper
# ----------------------------------------------------------------------------
def tms_forward(features, W, b_final, *, block_b=1024):
    """features: [..., n_inst, n_features]; W: [n_inst, d_hidden, n_features];
    b_final: [n_inst, n_features].  Returns same shape/dtype as features."""
    *lead, n_inst, n_feat = features.shape
    n_inst_w, d_hidden, n_feat_w = W.shape
    assert n_inst_w == n_inst and n_feat_w == n_feat

    B = 1
    for d in lead:
        B *= int(d)
    slab = n_inst * n_feat
    hid_slab = n_inst * d_hidden
    dtype = features.dtype
    itemsize = jnp.dtype(dtype).itemsize

    # Free, contiguous reshape — no HBM transpose pass.
    x2d = features.reshape(B, slab)

    # Batch tile: large enough to amortize per-step overhead (~0.35us/step),
    # small enough that the x/out double buffers stay well inside scoped VMEM
    # on every chip (v5e/v6e/v7x).
    vmem_budget = 8 * 1024 * 1024                       # bytes for x+out dbl bufs
    max_tb = max(8, vmem_budget // (4 * slab * itemsize))
    tb = min(block_b, B, max_tb)
    if tb < B:
        tb = max(8, (tb // 8) * 8)                      # sublane divisibility
    else:
        tb = B                                          # full-dim block is legal
    grid = (pl.cdiv(B, tb),)

    # Fast path: fold per-instance weights into block-diagonal matrices so the
    # whole forward is two MXU matmuls per batch tile.  Only when the folded
    # matrices stay tiny (<= ~1 MiB each at f32).
    use_fused = (slab <= 512) and (hid_slab <= 512)

    if use_fused:
        eye = jnp.eye(n_inst, dtype=W.dtype)
        # Wenc[(i*F+f),(j*H+h)] = delta_ij * W[i,h,f]
        w_enc = jnp.einsum('ij,ihf->ifjh', eye, W).reshape(slab, hid_slab)
        # Wdec[(i*H+h),(j*F+f)] = delta_ij * W[i,h,f]
        w_dec = jnp.einsum('ij,ihf->ihjf', eye, W).reshape(hid_slab, slab)
        b_slab = b_final.reshape(1, slab)

        cost = pl.CostEstimate(
            flops=4 * B * slab * hid_slab,
            transcendentals=0,
            bytes_accessed=(2 * B * slab + 2 * slab * hid_slab + slab) * itemsize,
        )

        out2d = pl.pallas_call(
            _tms_fused_kernel,
            out_shape=jax.ShapeDtypeStruct((B, slab), dtype),
            grid_spec=pltpu.PrefetchScalarGridSpec(
                num_scalar_prefetch=0,
                grid=grid,
                in_specs=[
                    pl.BlockSpec((tb, slab), lambda bi: (bi, 0)),
                    # Constant block index -> weights/bias stay VMEM-resident.
                    pl.BlockSpec((slab, hid_slab), lambda bi: (0, 0)),
                    pl.BlockSpec((hid_slab, slab), lambda bi: (0, 0)),
                    pl.BlockSpec((1, slab), lambda bi: (0, 0)),
                ],
                out_specs=pl.BlockSpec((tb, slab), lambda bi: (bi, 0)),
            ),
            compiler_params=pltpu.CompilerParams(
                dimension_semantics=("parallel",)),
            cost_estimate=cost,
        )(x2d, w_enc, w_dec, b_slab)
    else:
        cost = pl.CostEstimate(
            flops=4 * B * n_inst * d_hidden * n_feat,
            transcendentals=0,
            bytes_accessed=(2 * B * slab
                            + n_inst * d_hidden * n_feat
                            + n_inst * n_feat) * itemsize,
        )

        out2d = pl.pallas_call(
            _tms_loop_kernel,
            out_shape=jax.ShapeDtypeStruct((B, slab), dtype),
            grid_spec=pltpu.PrefetchScalarGridSpec(
                num_scalar_prefetch=0,
                grid=grid,
                in_specs=[
                    pl.BlockSpec((tb, slab), lambda bi: (bi, 0)),
                    pl.BlockSpec((n_inst, d_hidden, n_feat), lambda bi: (0, 0, 0)),
                    pl.BlockSpec((n_inst, n_feat), lambda bi: (0, 0)),
                ],
                out_specs=pl.BlockSpec((tb, slab), lambda bi: (bi, 0)),
            ),
            compiler_params=pltpu.CompilerParams(
                dimension_semantics=("parallel",)),
            cost_estimate=cost,
        )(x2d, W, b_final)

    # Free reshape back to [..., n_inst, n_features].
    return out2d.reshape(*lead, n_inst, n_feat)


# ----------------------------------------------------------------------------
# Parameter init (matches torch xavier_normal_ on (n_inst, d_hidden, n_feat))
# ----------------------------------------------------------------------------
def init_params(key, n_inst, d_hidden, n_features, dtype=jnp.float32):
    fan_in = d_hidden * n_features
    fan_out = n_inst * n_features
    std = (2.0 / (fan_in + fan_out)) ** 0.5
    W = std * jax.random.normal(key, (n_inst, d_hidden, n_features), dtype=dtype)
    b_final = jnp.zeros((n_inst, n_features), dtype=dtype)
    return W, b_final


def _reference(x, W, b_final):
    h = jnp.einsum('...if,ihf->...ih', x, W)
    return jax.nn.relu(jnp.einsum('...ih,ihf->...if', h, W) + b_final)


if __name__ == "__main__":
    key = jax.random.PRNGKey(0)
    k_w, k_b, k_x1, k_x2, k_x3 = jax.random.split(key, 5)

    batch = 8
    n_inst = 4
    d_hidden = 8
    n_features = 16

    W, b_final = init_params(k_w, n_inst, d_hidden, n_features)
    # Non-zero bias so the bias-add path is actually exercised.
    b_final = b_final + 0.1 * jax.random.normal(k_b, b_final.shape,
                                                dtype=b_final.dtype)

    # Case 1: single leading batch dim (fused path, single grid step).
    x1 = jax.random.normal(k_x1, (batch, n_inst, n_features), dtype=jnp.float32)
    out1 = jax.block_until_ready(tms_forward(x1, W, b_final))
    ref1 = _reference(x1, W, b_final)
    assert out1.shape == x1.shape
    assert jnp.allclose(out1, ref1, atol=1e-5, rtol=1e-5)

    # Case 2: multiple leading dims (exercises flatten/unflatten plumbing).
    x2 = jax.random.normal(k_x2, (2, 3, n_inst, n_features), dtype=jnp.float32)
    out2 = jax.block_until_ready(tms_forward(x2, W, b_final))
    ref2 = _reference(x2, W, b_final)
    assert out2.shape == x2.shape
    assert jnp.allclose(out2, ref2, atol=1e-5, rtol=1e-5)

    # Case 3: multi-tile grid with a ragged last tile (masked final store).
    x3 = jax.random.normal(k_x3, (40, n_inst, n_features), dtype=jnp.float32)
    out3 = jax.block_until_ready(tms_forward(x3, W, b_final, block_b=16))
    ref3 = _reference(x3, W, b_final)
    assert out3.shape == x3.shape
    assert jnp.allclose(out3, ref3, atol=1e-5, rtol=1e-5)

    print("KERNEL_OK")
</pallas_src>

<mosaic_0001>
module attributes {stable_mosaic.version = 11 : i64} {
  func.func @_tms_fused_kernel(%arg0: i32, %arg1: memref<8x64xf32, #tpu.memory_space<vmem>>, %arg2: memref<64x32xf32, #tpu.memory_space<vmem>>, %arg3: memref<32x64xf32, #tpu.memory_space<vmem>>, %arg4: memref<1x64xf32, #tpu.memory_space<vmem>>, %arg5: memref<8x64xf32, #tpu.memory_space<vmem>>) attributes {dimension_semantics = [#tpu.dimension_semantics<parallel>], iteration_bounds = array<i64: 1>, scalar_prefetch = 0 : i64, scratch_operands = 0 : i64, tpu.core_type = #tpu.core_type<tc>, window_params = [{transform_indices = @transform_0, window_bounds = array<i64: 8, 64>}, {pipeline_mode = #tpu.pipeline_mode<synchronous>, transform_indices = @transform_1, window_bounds = array<i64: 64, 32>}, {pipeline_mode = #tpu.pipeline_mode<synchronous>, transform_indices = @transform_2, window_bounds = array<i64: 32, 64>}, {pipeline_mode = #tpu.pipeline_mode<synchronous>, transform_indices = @transform_3, window_bounds = array<i64: 1, 64>}, {transform_indices = @transform_4, window_bounds = array<i64: 8, 64>}]} {
    %c0 = arith.constant 0 : index
    %c0_0 = arith.constant 0 : index
    %0 = vector.load %arg1[%c0, %c0_0] : memref<8x64xf32, #tpu.memory_space<vmem>>, vector<8x64xf32>
    %c0_1 = arith.constant 0 : index
    %c0_2 = arith.constant 0 : index
    %1 = vector.load %arg2[%c0_1, %c0_2] : memref<64x32xf32, #tpu.memory_space<vmem>>, vector<64x32xf32>
    %cst = arith.constant dense<0.000000e+00> : vector<8x32xf32>
    %2 = tpu.matmul %0, %1, %cst {dimension_numbers = #tpu.dot_dimension_numbers<[1], [0], [0], [1], [0, 0, 1, 1], [], []>} : vector<8x64xf32>, vector<64x32xf32>, vector<8x32xf32> -> vector<8x32xf32>
    %c0_3 = arith.constant 0 : index
    %c0_4 = arith.constant 0 : index
    %3 = vector.load %arg3[%c0_3, %c0_4] : memref<32x64xf32, #tpu.memory_space<vmem>>, vector<32x64xf32>
    %cst_5 = arith.constant dense<0.000000e+00> : vector<8x64xf32>
    %4 = tpu.matmul %2, %3, %cst_5 {dimension_numbers = #tpu.dot_dimension_numbers<[1], [0], [0], [1], [0, 0, 1, 1], [], []>} : vector<8x32xf32>, vector<32x64xf32>, vector<8x64xf32> -> vector<8x64xf32>
    %c0_6 = arith.constant 0 : index
    %c0_7 = arith.constant 0 : index
    %5 = vector.load %arg4[%c0_6, %c0_7] : memref<1x64xf32, #tpu.memory_space<vmem>>, vector<1x64xf32>
    %6 = vector.broadcast %5 : vector<1x64xf32> to vector<8x64xf32>
    %7 = arith.addf %4, %6 : vector<8x64xf32>
    %cst_8 = arith.constant 0.000000e+00 : f32
    %8 = vector.broadcast %cst_8 : f32 to vector<8x64xf32>
    %9 = arith.maximumf %7, %8 : vector<8x64xf32>
    %c0_9 = arith.constant 0 : index
    %c0_10 = arith.constant 0 : index
    %10 = vector.load %arg5[%c0_9, %c0_10] : memref<8x64xf32, #tpu.memory_space<vmem>>, vector<8x64xf32>
    tpu.vector_store %arg5[%c0_9, %c0_10], %9 {strides = array<i32>} : memref<8x64xf32, #tpu.memory_space<vmem>>, vector<8x64xf32>,
    return
  }
  func.func @transform_0(%arg0: i32) -> (i32, i32) {
    %c0_i32 = arith.constant 0 : i32
    %c0_i32_0 = arith.constant 0 : i32
    return %arg0, %c0_i32 : i32, i32
  }
  func.func @transform_1(%arg0: i32) -> (i32, i32) {
    %c0_i32 = arith.constant 0 : i32
    %c0_i32_0 = arith.constant 0 : i32
    %c0_i32_1 = arith.constant 0 : i32
    return %c0_i32, %c0_i32_0 : i32, i32
  }
  func.func @transform_2(%arg0: i32) -> (i32, i32) {
    %c0_i32 = arith.constant 0 : i32
    %c0_i32_0 = arith.constant 0 : i32
    %c0_i32_1 = arith.constant 0 : i32
    return %c0_i32, %c0_i32_0 : i32, i32
  }
  func.func @transform_3(%arg0: i32) -> (i32, i32) {
    %c0_i32 = arith.constant 0 : i32
    %c0_i32_0 = arith.constant 0 : i32
    %c0_i32_1 = arith.constant 0 : i32
    return %c0_i32, %c0_i32_0 : i32, i32
  }
  func.func @transform_4(%arg0: i32) -> (i32, i32) {
    %c0_i32 = arith.constant 0 : i32
    %c0_i32_0 = arith.constant 0 : i32
    return %arg0, %c0_i32 : i32, i32
  }
}

</mosaic_0001>

<llo_original>
// kernel: tpu_custom_call.1
$region0: #{tpu_custom_call.1}
  #allocation0 [shape = 'u32[]', space=smem, size = 0x4, offset = 0x4, fixed_abs, tag = 'smem constant byte address 0x4 - core index']
  #allocation1 [shape = 'u32[144,128]{1,0:T(1,128)}', space=vmem, size = 0x12000, scoped, tag = 'internal scratch']
  %s0 = inlined_call_operand.vmem [shape: f32[8,64], index: 0, kind: input, shape index: {}]
  %s1 = inlined_call_operand.vmem [shape: f32[64,32], index: 1, kind: input, shape index: {}]
  %s2 = inlined_call_operand.vmem [shape: f32[32,64], index: 2, kind: input, shape index: {}]
  %s3 = inlined_call_operand.vmem [shape: f32[1,64], index: 3, kind: input, shape index: {}]
  %s4 = inlined_call_operand.hbm [shape: f32[8,64], index: 4, kind: output, shape index: {}]
  %s5 = sld [smem:[#allocation0]]
  $region26: #{tpu_custom_call.1} parent=0
    _
  %s7 = ssub.s32 1, %s5
  %s8 = scalar_select 0, %s7, %s5
  $region1: #{tpu_custom_call.1} parent=0
    #allocation2 [shape = 'u8[4096]{0}', space=vmem, size = 0x1000, scoped, tag = 'output window, operand 0, single buffered']
    #allocation3 [shape = 's32[1]{0}', space=sflag, size = 0x4, scoped, tag = 'scoped memory for tpu_custom_call.1']
    %9 = vsyncpa [#allocation3], 0
    // Predicated region
    $region2: #{tpu_custom_call.1} parent=1 // pred_check
      _
    $region3: #{tpu_custom_call.1} parent=1 // pred_check_branch
      %11 = sbr.rel (0) target = $region5
    $region4: #{tpu_custom_call.1} parent=1 // pred_region
      _
    $region5: #{tpu_custom_call.1} parent=1 // pred_fallthru
      _
    // Predicated region
    $region6: #{tpu_custom_call.1} parent=1 // pred_check
      _
    $region7: #{tpu_custom_call.1} parent=1 // pred_check_branch
      %13 = sbr.rel (0) target = $region9
    $region8: #{tpu_custom_call.1} parent=1 // pred_region
      _
    $region9: #{tpu_custom_call.1} parent=1 // pred_fallthru
      _
    // Predicated region
    $region10: #{tpu_custom_call.1} parent=1 // pred_check
      _
    $region11: #{tpu_custom_call.1} parent=1 // pred_check_branch
      %15 = sbr.rel (0) target = $region13
    $region12: #{tpu_custom_call.1} parent=1 // pred_region
      _
    $region13: #{tpu_custom_call.1} parent=1 // pred_fallthru
      _
    // Predicated region
    $region14: #{tpu_custom_call.1} parent=1 // pred_check
      _
    $region15: #{tpu_custom_call.1} parent=1 // pred_check_branch
      %17 = sbr.rel (0) target = $region17
    $region16: #{tpu_custom_call.1} parent=1 // pred_region
      _
    $region17: #{tpu_custom_call.1} parent=1 // pred_fallthru
      _
    %v18 = vld [vmem:[%s0] sm:$0xff]
    %v19 = vld [vmem:[%s1] sm:$0xff]
    %v20 = vld [vmem:[%s1 + $0x8] sm:$0xff]
    %v21 = vld [vmem:[%s1 + $0x10] sm:$0xff]
    %v22 = vld [vmem:[%s1 + $0x18] sm:$0xff]
    %v23 = vld [vmem:[%s1 + $0x20] sm:$0xff]
    %v24 = vld [vmem:[%s1 + $0x28] sm:$0xff]
    %v25 = vld [vmem:[%s1 + $0x30] sm:$0xff]
    %v26 = vld [vmem:[%s1 + $0x38] sm:$0xff]
    %vm27 = vcmask 523264
    %v29 = vsel %vm27, %v18, 0
    %31 = vmatprep.subr.mxu0 0.0
    %32 = vmatpush1.msra.mxu0 %v19
    %33 = vmatprep.subr.mxu0 0.0
    %34 = vmatpush1.msra.mxu0 %v20
    %35 = vmatprep.subr.mxu0 0.0
    %36 = vmatpush1.msra.mxu0 %v21
    %37 = vmatprep.subr.mxu0 0.0
    %38 = vmatpush1.msra.mxu0 %v22
    %39 = vmatprep.subr.mxu0 0.0
    %40 = vmatpush1.msra.mxu0 %v23
    %41 = vmatprep.subr.mxu0 0.0
    %42 = vmatpush1.msra.mxu0 %v24
    %43 = vmatprep.subr.mxu0 0.0
    %44 = vmatpush1.msra.mxu0 %v25
    %45 = vmatprep.subr.mxu0 0.0
    %46 = vmatpush1.msra.mxu0 %v26
    %47 = vmatprep.subr.mxu0 0.0
    %48 = vmatpush1.msra.mxu0 0.0
    %49 = vmatprep.subr.mxu0 0.0
    %50 = vmatpush1.msra.mxu0 0.0
    %51 = vmatprep.subr.mxu0 0.0
    %52 = vmatpush1.msra.mxu0 0.0
    %53 = vmatprep.subr.mxu0 0.0
    %54 = vmatpush1.msra.mxu0 0.0
    %55 = vmatprep.subr.mxu0 0.0
    %56 = vmatpush1.msra.mxu0 0.0
    %57 = vmatprep.subr.mxu0 0.0
    %58 = vmatpush1.msra.mxu0 0.0
    %59 = vmatprep.subr.mxu0 0.0
    %60 = vmatpush1.msra.mxu0 0.0
    %61 = vmatprep.subr.mxu0 0.0
    %62 = vmatpush1.msra.mxu0 0.0
    %63 = vmatprep.subr.mxu0 0.0
    %64 = vmatpush1.msra.mxu0 0.0
    %65 = vmatprep.subr.mxu0 0.0
    %66 = vmatpush1.msra.mxu0 0.0
    %67 = vmatprep.subr.mxu0 0.0
    %68 = vmatpush1.msra.mxu0 0.0
    %69 = vmatprep.subr.mxu0 0.0
    %70 = vmatpush1.msra.mxu0 0.0
    %71 = vmatprep.subr.mxu0 0.0
    %72 = vmatpush1.msra.mxu0 0.0
    %73 = vmatprep.subr.mxu0 0.0
    %74 = vmatpush1.msra.mxu0 0.0
    %75 = vmatprep.subr.mxu0 0.0
    %76 = vmatpush1.msra.mxu0 0.0
    %77 = vmatprep.subr.mxu0 0.0
    %78 = vmatpush1.msra.mxu0 0.0
    %79 = vmatprep.subr.mxu0 0.0
    %80 = vmatpush1.msra.mxu0 0.0
    %81 = vmatprep.subr.mxu0 0.0
    %82 = vmatpush1.msra.mxu0 0.0
    %83 = vmatprep.subr.mxu0 0.0
    %84 = vmatpush1.msra.mxu0 0.0
    %85 = vmatprep.subr.mxu0 0.0
    %86 = vmatpush1.msra.mxu0 0.0
    %87 = vmatprep.subr.mxu0 0.0
    %88 = vmatpush1.msra.mxu0 0.0
    %89 = vmatprep.subr.mxu0 0.0
    %90 = vmatpush1.msra.mxu0 0.0
    %91 = vmatprep.subr.mxu0 0.0
    %92 = vmatpush1.msra.mxu0 0.0
    %93 = vmatprep.subr.mxu0 0.0
    %94 = vmatpush1.msra.mxu0 0.0
    %95 = vmatprep.mubr.f32.mxu0 0.0
    %96 = vmatmul.mubr.f32.gmra.mrb[0].mxu0 %v29
    %v97 = vpop.f32.mrb[0].mxu0
    %v98 = vadd.f32 0.0, %v97
    %v99 = vpop.f32.mrb[0].mxu0
    %100 = vdwg.mxu0
    %v101 = vld [vmem:[%s2] sm:$0xff]
    %v102 = vld [vmem:[%s2 + $0x8] sm:$0xff]
    %v103 = vld [vmem:[%s2 + $0x10] sm:$0xff]
    %v104 = vld [vmem:[%s2 + $0x18] sm:$0xff]
    %v105 = vld [vmem:[%s3] sm:$0x1]
    %v107 = vlaneseq
    %v108 = vshrl.u32 %v107, 7
    %v109 = vsub.s32 0, %v108
    %v110 = vrot.slane %v105, %v109
    %vm112 = vcmask 261120
    %v114 = vsel %vm112, %v98, 0
    %116 = vmatprep.subr.mxu0 0.0
    %117 = vmatpush1.msra.mxu0 %v101
    %118 = vmatprep.subr.mxu0 0.0
    %119 = vmatpush1.msra.mxu0 %v102
    %120 = vmatprep.subr.mxu0 0.0
    %121 = vmatpush1.msra.mxu0 %v103
    %122 = vmatprep.subr.mxu0 0.0
    %123 = vmatpush1.msra.mxu0 %v104
    %124 = vmatprep.subr.mxu0 0.0
    %125 = vmatpush1.msra.mxu0 0.0
    %126 = vmatprep.subr.mxu0 0.0
    %127 = vmatpush1.msra.mxu0 0.0
    %128 = vmatprep.subr.mxu0 0.0
    %129 = vmatpush1.msra.mxu0 0.0
    %130 = vmatprep.subr.mxu0 0.0
    %131 = vmatpush1.msra.mxu0 0.0
    %132 = vmatprep.subr.mxu0 0.0
    %133 = vmatpush1.msra.mxu0 0.0
    %134 = vmatprep.subr.mxu0 0.0
    %135 = vmatpush1.msra.mxu0 0.0
    %136 = vmatprep.subr.mxu0 0.0
    %137 = vmatpush1.msra.mxu0 0.0
    %138 = vmatprep.subr.mxu0 0.0
    %139 = vmatpush1.msra.mxu0 0.0
    %140 = vmatprep.subr.mxu0 0.0
    %141 = vmatpush1.msra.mxu0 0.0
    %142 = vmatprep.subr.mxu0 0.0
    %143 = vmatpush1.msra.mxu0 0.0
    %144 = vmatprep.subr.mxu0 0.0
    %145 = vmatpush1.msra.mxu0 0.0
    %146 = vmatprep.subr.mxu0 0.0
    %147 = vmatpush1.msra.mxu0 0.0
    %148 = vmatprep.subr.mxu0 0.0
    %149 = vmatpush1.msra.mxu0 0.0
    %150 = vmatprep.subr.mxu0 0.0
    %151 = vmatpush1.msra.mxu0 0.0
    %152 = vmatprep.subr.mxu0 0.0
    %153 = vmatpush1.msra.mxu0 0.0
    %154 = vmatprep.subr.mxu0 0.0
    %155 = vmatpush1.msra.mxu0 0.0
    %156 = vmatprep.subr.mxu0 0.0
    %157 = vmatpush1.msra.mxu0 0.0
    %158 = vmatprep.subr.mxu0 0.0
    %159 = vmatpush1.msra.mxu0 0.0
    %160 = vmatprep.subr.mxu0 0.0
    %161 = vmatpush1.msra.mxu0 0.0
    %162 = vmatprep.subr.mxu0 0.0
    %163 = vmatpush1.msra.mxu0 0.0
    %164 = vmatprep.subr.mxu0 0.0
    %165 = vmatpush1.msra.mxu0 0.0
    %166 = vmatprep.subr.mxu0 0.0
    %167 = vmatpush1.msra.mxu0 0.0
    %168 = vmatprep.subr.mxu0 0.0
    %169 = vmatpush1.msra.mxu0 0.0
    %170 = vmatprep.subr.mxu0 0.0
    %171 = vmatpush1.msra.mxu0 0.0
    %172 = vmatprep.subr.mxu0 0.0
    %173 = vmatpush1.msra.mxu0 0.0
    %174 = vmatprep.subr.mxu0 0.0
    %175 = vmatpush1.msra.mxu0 0.0
    %176 = vmatprep.subr.mxu0 0.0
    %177 = vmatpush1.msra.mxu0 0.0
    %178 = vmatprep.subr.mxu0 0.0
    %179 = vmatpush1.msra.mxu0 0.0
    %180 = vmatprep.mubr.f32.mxu0 0.0
    %181 = vmatmul.mubr.f32.gmra.mrb[0].mxu0 %v114
    %v182 = vpop.f32.mrb[0].mxu0
    %v183 = vadd.f32 %v110, %v182
    %v184 = vpop.f32.mrb[0].mxu0
    %185 = vdwg.mxu0
    %v186 = vmax.f32 %v183, 0.0
    %187 = vst.msk [vmem:[#allocation2] sm:$0xff] %vm27, %v186
    // Predicated region
    $region18: #{tpu_custom_call.1} parent=1 // pred_check
      _
    $region19: #{tpu_custom_call.1} parent=1 // pred_check_branch
      %189 = sbr.rel (0) target = $region21
    $region20: #{tpu_custom_call.1} parent=1 // pred_region
      %s191 = ssub.s32 128, 128
      %192 = vsyncadd [#allocation3], %s191
      %s194 = sshll.u32 [#allocation2], 4
      %s195 = int_to_ptr.vmem [resolvable:$true] %s194
      %197 = dma.vmem_to_hbm [thread:$0]  %s195, 128, %s4, [#allocation3]
    $region21: #{tpu_custom_call.1} parent=1 // pred_fallthru
      _
    // Predicated region
    $region22: #{tpu_custom_call.1} parent=1 // pred_check
      _
    $region23: #{tpu_custom_call.1} parent=1 // pred_check_branch
      %199 = sbr.rel (0) target = $region25
    $region24: #{tpu_custom_call.1} parent=1 // pred_region
      %200 = dma.done [#allocation3], 128
    $region25: #{tpu_custom_call.1} parent=1 // pred_fallthru
      _
    %201 = vsyncpa [#allocation3], 1

</llo_original>
